<compile_context>
chip_gen: v7x
topology: tpu7x:2x2x1
jax: 0.10.0
libtpu: 0.0.40
codegen_flags: <defaults>
</compile_context>

<pallas_src>
import functools

import jax
import jax.numpy as jnp
from jax.experimental import pallas as pl
from jax.experimental.pallas import tpu as pltpu


# ----------------------------------------------------------------------------
# Kernels
# ----------------------------------------------------------------------------
def _down_fused_kernel(p_ref, w_ref, o_ref, *, eps, inv_m):
    # p_ref: (1, K, M)   bf16 im2col patches for this batch element
    # w_ref: (Cout, K)   bf16 flattened conv weight (shared across the grid)
    # o_ref: (1, Cout, M) output block (M on lanes -> lane-dense stores,
    #                     reshapes directly to NCHW in the wrapper)
    y = jnp.dot(w_ref[...], p_ref[0],
                preferred_element_type=jnp.float32)          # (Cout, M) f32
    # InstanceNorm2d(affine=False): per-channel stats over the spatial axis
    # (lane reduce on the XLU).  inv_m is a Python-float literal: no division.
    mean = jnp.sum(y, axis=-1, keepdims=True) * inv_m        # (Cout, 1)
    d = y - mean
    var = jnp.sum(d * d, axis=-1, keepdims=True) * inv_m     # biased variance
    yn = d * jax.lax.rsqrt(var + eps)                        # EUP rsqrt
    o_ref[0] = jnp.maximum(yn, 0.0).astype(o_ref.dtype)


def _conv_stats_kernel(p_ref, w_ref, y_ref, s_ref):
    # Tiled pass 1: conv matmul for one (batch, M-tile) block + partial stats.
    # p_ref: (1, K, tM) bf16, w_ref: (Cout, K) bf16
    # y_ref: (1, Cout, tM) f32 un-normalized conv output
    # s_ref: (1, Cout, 2) f32 resident accumulator over the M axis:
    #        [:, :, 0] = sum, [:, :, 1] = sum of squares
    y = jnp.dot(w_ref[...], p_ref[0],
                preferred_element_type=jnp.float32)          # (Cout, tM) f32
    y_ref[0] = y.astype(y_ref.dtype)

    @pl.when(pl.program_id(1) == 0)
    def _():
        s_ref[...] = jnp.zeros_like(s_ref)

    psum = jnp.sum(y, axis=-1, keepdims=True)                # (Cout, 1)
    psq = jnp.sum(y * y, axis=-1, keepdims=True)             # (Cout, 1)
    s_ref[0] += jnp.concatenate([psum, psq], axis=-1)        # (Cout, 2)


def _norm_relu_kernel(y_ref, s_ref, o_ref, *, eps, inv_m):
    # Tiled pass 2: normalize + ReLU one (batch, M-tile) block.
    y = y_ref[0]                                             # (Cout, tM) f32
    s = s_ref[0]                                             # (Cout, 2)  f32
    mean = s[:, 0:1] * inv_m
    var = s[:, 1:2] * inv_m - mean * mean
    var = jnp.maximum(var, 0.0)
    yn = (y - mean) * jax.lax.rsqrt(var + eps)
    o_ref[0] = jnp.maximum(yn, 0.0).astype(o_ref.dtype)


# ----------------------------------------------------------------------------
# VMEM budgeting helpers
# ----------------------------------------------------------------------------
def _select_vmem_limit_bytes():
    """Generation-dependent VMEM limit with headroom for Mosaic scratch."""
    cap = 64 * 1024 * 1024  # conservative fallback (v7x-sized)
    try:
        info = pltpu.get_tpu_info()
        cap = int(getattr(info, "vmem_capacity_bytes", cap))
    except Exception:
        pass
    # ~80% of physical, capped at 100 MiB (v5e/v6e: ~100 MiB of 128 MiB;
    # v7x: ~51 MiB of 64 MiB -> inside the recommended 48-56 MiB band).
    return int(min(cap * 0.8, 100 * 1024 * 1024))


def _fused_vmem_bytes(K, M, Cout):
    patches = 2 * K * M * 2          # bf16, double-buffered
    weight = 2 * Cout * K * 2        # bf16, double-buffered
    out = 2 * Cout * M * 4           # f32 output block, double-buffered
    work = 3 * Cout * M * 4          # f32 compute temporaries (rough)
    return patches + weight + out + work


def _tiled_step_vmem_bytes(K, tm, Cout):
    return (2 * K * tm * 2 + 2 * Cout * K * 2 +
            2 * Cout * tm * 4 + 3 * Cout * tm * 4 + 2 * Cout * 2 * 4)


# ----------------------------------------------------------------------------
# Wrapper
# ----------------------------------------------------------------------------
def down_pallas(x, weight, bias=None, eps=1e-5, *, block_m=None):
    """Forward pass of `Down` for NCHW input x.

    x:      (B, Cin, H, W)
    weight: (Cout, Cin, 3, 3)
    bias:   (Cout,) or None.  Ignored: with InstanceNorm2d(affine=False) a
            per-channel bias is exactly cancelled by the mean subtraction.
    block_m: force the M-tiled two-pass path with this tile (multiple of 128).
    returns (B, Cout, Ho, Wo) with Ho = (H+2-3)//2 + 1, Wo likewise.
    """
    del bias  # cancelled exactly by the instance-norm mean subtraction
    B, Cin, H, W = x.shape
    Cout, Cin_w, KH, KW = weight.shape
    assert Cin == Cin_w and KH == 3 and KW == 3, "Down expects a 3x3 conv weight"

    Ho = (H + 2 - 3) // 2 + 1
    Wo = (W + 2 - 3) // 2 + 1
    M = Ho * Wo
    K = Cin * 9

    # --- im2col directly in (B, K, M) layout, bf16 -------------------------
    # pad=1 on both spatial dims, stride 2, kernel 3.  K order is
    # (cin, kh, kw), matching weight.reshape(Cout, Cin*9) row order, so only a
    # reshape (no transpose) is needed after the stack.
    xp = jnp.pad(x, ((0, 0), (0, 0), (1, 1), (1, 1))).astype(jnp.bfloat16)
    cols = [xp[:, :, kh:kh + 2 * Ho:2, kw:kw + 2 * Wo:2]
            for kh in range(3) for kw in range(3)]            # 9 x (B,Cin,Ho,Wo)
    patches = jnp.stack(cols, axis=2).reshape(B, K, M)        # (B, K, M) bf16
    w_mat = weight.reshape(Cout, K).astype(jnp.bfloat16)      # (Cout, K) bf16

    vmem_limit = _select_vmem_limit_bytes()
    eps = float(eps)
    inv_m = 1.0 / float(M)   # true M: zero-padded columns add 0 to sum/sumsq

    use_fused = (block_m is None and
                 _fused_vmem_bytes(K, M, Cout) <= int(0.75 * vmem_limit))

    if use_fused:
        out = pl.pallas_call(
            functools.partial(_down_fused_kernel, eps=eps, inv_m=inv_m),
            out_shape=jax.ShapeDtypeStruct((B, Cout, M), x.dtype),
            grid_spec=pltpu.PrefetchScalarGridSpec(
                num_scalar_prefetch=0,
                grid=(B,),
                in_specs=[
                    pl.BlockSpec((1, K, M), lambda b: (b, 0, 0)),   # patches
                    pl.BlockSpec((Cout, K), lambda b: (0, 0)),      # weight
                ],
                out_specs=pl.BlockSpec((1, Cout, M), lambda b: (b, 0, 0)),
            ),
            compiler_params=pltpu.CompilerParams(
                # Disjoint per-batch output blocks -> batch axis can shard
                # across TensorCores.
                dimension_semantics=("parallel",),
                vmem_limit_bytes=vmem_limit,
            ),
        )(patches, w_mat)
        # (B, Cout, M) is already channel-major: pure reshape to NCHW.
        return out.reshape(B, Cout, Ho, Wo)

    # --- M-tiled two-pass fallback (bounds VMEM, e.g. v7x 64 MiB) ----------
    if block_m is not None:
        assert block_m % 128 == 0, "block_m must be a multiple of 128"
        tm = block_m
    else:
        tm = 128
        for cand in (1024, 512, 256, 128):
            if _tiled_step_vmem_bytes(K, cand, Cout) <= int(0.75 * vmem_limit):
                tm = cand
                break

    n_mt = pl.cdiv(M, tm)
    M_pad = n_mt * tm
    if M_pad != M:
        # Zero-padded spatial columns give y == 0 (no bias), so they add 0 to
        # both sum and sumsq; dividing by the true M keeps the stats exact.
        patches = jnp.pad(patches, ((0, 0), (0, 0), (0, M_pad - M)))

    # Pass 1: conv matmul + per-channel sum / sumsq.
    y, stats = pl.pallas_call(
        _conv_stats_kernel,
        out_shape=(jax.ShapeDtypeStruct((B, Cout, M_pad), jnp.float32),
                   jax.ShapeDtypeStruct((B, Cout, 2), jnp.float32)),
        grid_spec=pltpu.PrefetchScalarGridSpec(
            num_scalar_prefetch=0,
            grid=(B, n_mt),
            in_specs=[
                pl.BlockSpec((1, K, tm), lambda b, m: (b, 0, m)),
                pl.BlockSpec((Cout, K), lambda b, m: (0, 0)),
            ],
            out_specs=[
                pl.BlockSpec((1, Cout, tm), lambda b, m: (b, 0, m)),
                pl.BlockSpec((1, Cout, 2), lambda b, m: (b, 0, 0)),  # resident acc
            ],
        ),
        compiler_params=pltpu.CompilerParams(
            dimension_semantics=("parallel", "arbitrary"),
            vmem_limit_bytes=vmem_limit,
        ),
    )(patches, w_mat)

    # Pass 2: normalize + ReLU.
    out = pl.pallas_call(
        functools.partial(_norm_relu_kernel, eps=eps, inv_m=inv_m),
        out_shape=jax.ShapeDtypeStruct((B, Cout, M_pad), x.dtype),
        grid_spec=pltpu.PrefetchScalarGridSpec(
            num_scalar_prefetch=0,
            grid=(B, n_mt),
            in_specs=[
                pl.BlockSpec((1, Cout, tm), lambda b, m: (b, 0, m)),
                pl.BlockSpec((1, Cout, 2), lambda b, m: (b, 0, 0)),
            ],
            out_specs=pl.BlockSpec((1, Cout, tm), lambda b, m: (b, 0, m)),
        ),
        compiler_params=pltpu.CompilerParams(
            dimension_semantics=("parallel", "parallel"),
            vmem_limit_bytes=vmem_limit,
        ),
    )(y, stats)

    return out[:, :, :M].reshape(B, Cout, Ho, Wo)


# ----------------------------------------------------------------------------
# Pure-JAX reference (PyTorch forward semantics) for sanity checking
# ----------------------------------------------------------------------------
def _reference_down(x, weight, bias=None, eps=1e-5):
    y = jax.lax.conv_general_dilated(
        x, weight, window_strides=(2, 2), padding=((1, 1), (1, 1)),
        dimension_numbers=("NCHW", "OIHW", "NCHW"))
    if bias is not None:
        y = y + bias.reshape(1, -1, 1, 1)
    mu = jnp.mean(y, axis=(2, 3), keepdims=True)
    var = jnp.mean((y - mu) ** 2, axis=(2, 3), keepdims=True)
    yn = (y - mu) * jax.lax.rsqrt(var + eps)
    return jnp.maximum(yn, 0.0)


if __name__ == "__main__":
    key = jax.random.PRNGKey(0)
    k1, k2, k3, k4, k5 = jax.random.split(key, 5)

    # --- Test 1: small shape -> fused single-block-per-batch path ---------
    B, in_ch, out_ch, H, W = 2, 4, 8, 16, 16
    x = jax.random.uniform(k1, (B, in_ch, H, W), dtype=jnp.float32)
    weight = jax.random.normal(k2, (out_ch, in_ch, 3, 3), dtype=jnp.float32) * 0.1
    bias = jax.random.normal(k3, (out_ch,), dtype=jnp.float32) * 0.1

    out = jax.block_until_ready(down_pallas(x, weight, bias))
    assert out.shape == (B, out_ch, H // 2, W // 2), out.shape

    # Reference uses the same bf16-rounded operands the kernel's MXU sees;
    # the bias is kept in the reference to demonstrate it cancels exactly.
    xq = x.astype(jnp.bfloat16).astype(jnp.float32)
    wq = weight.astype(jnp.bfloat16).astype(jnp.float32)
    ref = _reference_down(xq, wq, bias)
    err = float(jnp.max(jnp.abs(out - ref)))
    assert jnp.allclose(out, ref, rtol=1e-2, atol=1e-2), err

    # --- Test 2: force the M-tiled two-pass path (with spatial padding) ---
    B2, in2, out2_ch, H2, W2 = 1, 8, 16, 30, 30   # M = 15*15 = 225 -> padded
    x2 = jax.random.uniform(k4, (B2, in2, H2, W2), dtype=jnp.float32)
    w2 = jax.random.normal(k5, (out2_ch, in2, 3, 3), dtype=jnp.float32) * 0.1

    out2 = jax.block_until_ready(down_pallas(x2, w2, None, block_m=128))
    assert out2.shape == (B2, out2_ch, 15, 15), out2.shape
    ref2 = _reference_down(x2.astype(jnp.bfloat16).astype(jnp.float32),
                           w2.astype(jnp.bfloat16).astype(jnp.float32), None)
    err2 = float(jnp.max(jnp.abs(out2 - ref2)))
    assert jnp.allclose(out2, ref2, rtol=1e-2, atol=1e-2), err2

    print("KERNEL_OK")
</pallas_src>

<mosaic_0001>
module attributes {stable_mosaic.version = 11 : i64} {
  func.func @_down_fused_kernel(%arg0: i32, %arg1: memref<1x36x64xbf16, #tpu.memory_space<vmem>>, %arg2: memref<8x36xbf16, #tpu.memory_space<vmem>>, %arg3: memref<1x8x64xf32, #tpu.memory_space<vmem>>) attributes {dimension_semantics = [#tpu.dimension_semantics<parallel>], iteration_bounds = array<i64: 2>, scalar_prefetch = 0 : i64, scratch_operands = 0 : i64, tpu.core_type = #tpu.core_type<tc>, window_params = [{transform_indices = @transform_0, window_bounds = array<i64: 1, 36, 64>}, {pipeline_mode = #tpu.pipeline_mode<synchronous>, transform_indices = @transform_1, window_bounds = array<i64: 8, 36>}, {transform_indices = @transform_2, window_bounds = array<i64: 1, 8, 64>}]} {
    %c0 = arith.constant 0 : index
    %c0_0 = arith.constant 0 : index
    %0 = vector.load %arg2[%c0, %c0_0] : memref<8x36xbf16, #tpu.memory_space<vmem>>, vector<8x36xbf16>
    %c0_1 = arith.constant 0 : index
    %c0_2 = arith.constant 0 : index
    %c0_3 = arith.constant 0 : index
    %1 = vector.load %arg1[%c0_1, %c0_2, %c0_3] : memref<1x36x64xbf16, #tpu.memory_space<vmem>>, vector<1x36x64xbf16>
    %2 = vector.shape_cast %1 : vector<1x36x64xbf16> to vector<36x64xbf16>
    %cst = arith.constant dense<0.000000e+00> : vector<8x64xf32>
    %3 = tpu.matmul %0, %2, %cst {dimension_numbers = #tpu.dot_dimension_numbers<[1], [0], [0], [1], [0, 0, 1, 1], [], []>} : vector<8x36xbf16>, vector<36x64xbf16>, vector<8x64xf32> -> vector<8x64xf32>
    %cst_4 = arith.constant dense<0.000000e+00> : vector<8xf32>
    %4 = vector.multi_reduction <add>, %3, %cst_4 [1] : vector<8x64xf32> to vector<8xf32>
    %5 = vector.shape_cast %4 : vector<8xf32> to vector<8x1xf32>
    %cst_5 = arith.constant 1.562500e-02 : f32
    %6 = vector.broadcast %cst_5 : f32 to vector<8x1xf32>
    %7 = arith.mulf %5, %6 : vector<8x1xf32>
    %8 = vector.broadcast %7 : vector<8x1xf32> to vector<8x64xf32>
    %9 = arith.subf %3, %8 : vector<8x64xf32>
    %10 = arith.mulf %9, %9 : vector<8x64xf32>
    %cst_6 = arith.constant dense<0.000000e+00> : vector<8xf32>
    %11 = vector.multi_reduction <add>, %10, %cst_6 [1] : vector<8x64xf32> to vector<8xf32>
    %12 = vector.shape_cast %11 : vector<8xf32> to vector<8x1xf32>
    %cst_7 = arith.constant 1.562500e-02 : f32
    %13 = vector.broadcast %cst_7 : f32 to vector<8x1xf32>
    %14 = arith.mulf %12, %13 : vector<8x1xf32>
    %cst_8 = arith.constant 9.99999974E-6 : f32
    %15 = vector.broadcast %cst_8 : f32 to vector<8x1xf32>
    %16 = arith.addf %14, %15 : vector<8x1xf32>
    %17 = math.rsqrt %16 : vector<8x1xf32>
    %18 = vector.broadcast %17 : vector<8x1xf32> to vector<8x64xf32>
    %19 = arith.mulf %9, %18 : vector<8x64xf32>
    %cst_9 = arith.constant 0.000000e+00 : f32
    %20 = vector.broadcast %cst_9 : f32 to vector<8x64xf32>
    %21 = arith.maximumf %19, %20 : vector<8x64xf32>
    %c0_10 = arith.constant 0 : index
    %c0_11 = arith.constant 0 : index
    %c0_12 = arith.constant 0 : index
    %22 = vector.load %arg3[%c0_10, %c0_11, %c0_12] : memref<1x8x64xf32, #tpu.memory_space<vmem>>, vector<1x8x64xf32>
    %23 = vector.shape_cast %22 : vector<1x8x64xf32> to vector<8x64xf32>
    %24 = vector.shape_cast %21 : vector<8x64xf32> to vector<1x8x64xf32>
    tpu.vector_store %arg3[%c0_10, %c0_11, %c0_12], %24 {strides = array<i32>} : memref<1x8x64xf32, #tpu.memory_space<vmem>>, vector<1x8x64xf32>,
    return
  }
  func.func @transform_0(%arg0: i32) -> (i32, i32, i32) {
    %c0_i32 = arith.constant 0 : i32
    %c0_i32_0 = arith.constant 0 : i32
    %c0_i32_1 = arith.constant 0 : i32
    return %arg0, %c0_i32, %c0_i32_0 : i32, i32, i32
  }
  func.func @transform_1(%arg0: i32) -> (i32, i32) {
    %c0_i32 = arith.constant 0 : i32
    %c0_i32_0 = arith.constant 0 : i32
    %c0_i32_1 = arith.constant 0 : i32
    return %c0_i32, %c0_i32_0 : i32, i32
  }
  func.func @transform_2(%arg0: i32) -> (i32, i32, i32) {
    %c0_i32 = arith.constant 0 : i32
    %c0_i32_0 = arith.constant 0 : i32
    %c0_i32_1 = arith.constant 0 : i32
    return %arg0, %c0_i32, %c0_i32_0 : i32, i32, i32
  }
}

</mosaic_0001>

<llo_original>
// kernel: tpu_custom_call.1
$region0: #{tpu_custom_call.1}
  #allocation0 [shape = 'u32[]', space=smem, size = 0x4, offset = 0x4, fixed_abs, tag = 'smem constant byte address 0x4 - core index']
  #allocation1 [shape = 'u32[144,128]{1,0:T(1,128)}', space=vmem, size = 0x12000, scoped, tag = 'internal scratch']
  %s0 = inlined_call_operand.vmem [shape: bf16[2,36,64], index: 0, kind: input, shape index: {}]
  %s1 = inlined_call_operand.vmem [shape: bf16[8,36], index: 1, kind: input, shape index: {}]
  %s2 = inlined_call_operand.hbm [shape: f32[2,8,64], index: 2, kind: output, shape index: {}]
  %s3 = sld [smem:[#allocation0]]
  $region41: #{tpu_custom_call.1} parent=0
    _
  %s5 = ssub.s32 1, %s3
  %s6 = scalar_select 0, %s5, %s3
  $region1: #{tpu_custom_call.1} parent=0
    #allocation2 [shape = 'u8[8192]{0}', space=vmem, size = 0x2000, scoped, tag = 'output window, operand 0']
    #allocation3 [shape = 's32[2]{0}', space=sflag, size = 0x8, scoped, tag = 'scoped memory for tpu_custom_call.1']
    %7 = vsyncpa [#allocation3], 0
    %s8 = scalar_lea.sflag [#allocation3], 1
    %9 = vsyncpa %s8, 0
    loop: start=0, step=1, limit=4
    $region2: #{tpu_custom_call.1} parent=1 // loop_pre_header
      _
    $region3: #{tpu_custom_call.1} parent=1 // loop_header
      %s11 = sphi 0, %s15
      %p12 = scmp.ge.s32.totalorder %s11, 4
      %s21 = sphi 0, %s23
      %s24 = sphi 0, %s21
      %s25 = sphi 0, %s24
      %s41 = sphi 0, %s25
      %s45 = sphi 0, %s45
      %s47 = sphi 0, %s45
      %s48 = sphi 0, %s47
      %s62 = sphi 0, %s48
      %s68 = sphi 0, %s70
      %s71 = sphi 0, %s68
      %s72 = sphi 0, %s71
      %s88 = sphi 0, %s72
    $region4: #{tpu_custom_call.1} parent=1 // loop_header_branch
      %14 = sbr.rel (%p12) target = $region8
    $region5: #{tpu_custom_call.1} parent=1 // loop_body
      %s16 = ssub.s32 %s11, 1
      %s17 = ssub.s32 %s11, 2
      %s18 = sadd.s32 %s11, 1
      %s19 = ssub.s32 %s11, %s18
      %p20 = scmp.eq.s32.totalorder %s19, 0
      %s22 = sadd.s32 %s21, 1
      %s23 = scalar_select %p20, %s21, %s22
      %p26 = pneg %p20
      %p27 = scmp.eq.s32.totalorder %s11, 1
      %p28 = por %p26, %p27
      %p29 = scmp.ne.s32.totalorder %s21, %s24
      %p30 = scmp.eq.s32.totalorder %s11, 0
      %p31 = por %p29, %p30
      %p32 = scmp.ne.s32.totalorder %s21, %s24
      %p33 = scmp.eq.s32.totalorder %s16, 1
      %p34 = por %p32, %p33
      %p35 = scmp.ne.s32.totalorder %s24, %s25
      %p36 = scmp.eq.s32.totalorder %s16, 0
      %p37 = por %p35, %p36
      %p38 = scmp.ne.s32.totalorder %s24, %s25
      %p39 = scmp.eq.s32.totalorder %s17, 1
      %p40 = por %p38, %p39
      %p42 = scmp.ne.s32.totalorder %s25, %s41
      %p43 = scmp.eq.s32.totalorder %s17, 0
      %p44 = por %p42, %p43
      %s46 = sadd.s32 %s45, 1
      %p49 = scmp.eq.s32.totalorder %s11, 1
      %p50 = scmp.ne.s32.totalorder %s45, %s47
      %p51 = scmp.eq.s32.totalorder %s11, 0
      %p52 = por %p50, %p51
      %p53 = scmp.ne.s32.totalorder %s45, %s47
      %p54 = scmp.eq.s32.totalorder %s16, 1
      %p55 = por %p53, %p54
      %p56 = scmp.ne.s32.totalorder %s47, %s48
      %p57 = scmp.eq.s32.totalorder %s16, 0
      %p58 = por %p56, %p57
      %p59 = scmp.ne.s32.totalorder %s47, %s48
      %p60 = scmp.eq.s32.totalorder %s17, 1
      %p61 = por %p59, %p60
      %p63 = scmp.ne.s32.totalorder %s48, %s62
      %p64 = scmp.eq.s32.totalorder %s17, 0
      %p65 = por %p63, %p64
      %s66 = ssub.s32 %s11, %s18
      %p67 = scmp.eq.s32.totalorder %s66, 0
      %s69 = sadd.s32 %s68, 1
      %s70 = scalar_select %p67, %s68, %s69
      %p73 = pneg %p67
      %p74 = scmp.eq.s32.totalorder %s11, 1
      %p75 = por %p73, %p74
      %p76 = scmp.ne.s32.totalorder %s68, %s71
      %p77 = scmp.eq.s32.totalorder %s11, 0
      %p78 = por %p76, %p77
      %p79 = scmp.ne.s32.totalorder %s68, %s71
      %p80 = scmp.eq.s32.totalorder %s16, 1
      %p81 = por %p79, %p80
      %p82 = scmp.ne.s32.totalorder %s71, %s72
      %p83 = scmp.eq.s32.totalorder %s16, 0
      %p84 = por %p82, %p83
      %p85 = scmp.ne.s32.totalorder %s71, %s72
      %p86 = scmp.eq.s32.totalorder %s17, 1
      %p87 = por %p85, %p86
      %p89 = scmp.ne.s32.totalorder %s72, %s88
      %p90 = scmp.eq.s32.totalorder %s17, 0
      %p91 = por %p89, %p90
      %p92 = scmp.le.s32.totalorder 1, %s11
      %p93 = scmp.lt.s32.totalorder %s11, 3
      %p94 = pnand %p92, %p93
      %p95 = pneg %p94
      // Predicated region
      $region9: #{tpu_custom_call.1} parent=5 // pred_check
        _
      $region10: #{tpu_custom_call.1} parent=5 // pred_check_branch
        %97 = sbr.rel (%p94) target = $region12
      $region11: #{tpu_custom_call.1} parent=5 // pred_region
        %s98 = ssub.s32 %s11, 1
        // Predicated region
        $region13: #{tpu_custom_call.1} parent=11 // pred_check
          %p99 = pneg %p58
        $region14: #{tpu_custom_call.1} parent=11 // pred_check_branch
          %101 = sbr.rel (%p99) target = $region16
        $region15: #{tpu_custom_call.1} parent=11 // pred_region
          _
        $region16: #{tpu_custom_call.1} parent=11 // pred_fallthru
          _
      $region12: #{tpu_custom_call.1} parent=5 // pred_fallthru
        _
      %p102 = scmp.lt.s32.totalorder %s11, 2
      // Predicated region
      $region17: #{tpu_custom_call.1} parent=5 // pred_check
        %p103 = pneg %p102
      $region18: #{tpu_custom_call.1} parent=5 // pred_check_branch
        %105 = sbr.rel (%p103) target = $region20
      $region19: #{tpu_custom_call.1} parent=5 // pred_region
        // Predicated region
        $region21: #{tpu_custom_call.1} parent=19 // pred_check
          %p106 = pneg %p31
        $region22: #{tpu_custom_call.1} parent=19 // pred_check_branch
          %108 = sbr.rel (%p106) target = $region24
        $region23: #{tpu_custom_call.1} parent=19 // pred_region
          %p109 = scmp.lt.s32.totalorder %s11, 1
          %s110 = scalar_select %p109, %s11, 1
          %s111 = smul.addr %s110, 5
          %s112 = smul.addr %s111, 4
          %s113 = scalar_lea.vmem %s0, %s112
        $region24: #{tpu_custom_call.1} parent=19 // pred_fallthru
          _
      $region20: #{tpu_custom_call.1} parent=5 // pred_fallthru
        _
      %p114 = scmp.le.s32.totalorder 1, %s11
      %p115 = scmp.lt.s32.totalorder %s11, 3
      %p116 = pnand %p114, %p115
      %p117 = pneg %p116
      // Predicated region
      $region25: #{tpu_custom_call.1} parent=5 // pred_check
        _
      $region26: #{tpu_custom_call.1} parent=5 // pred_check_branch
        %119 = sbr.rel (%p116) target = $region28
      $region27: #{tpu_custom_call.1} parent=5 // pred_region
        %s120 = ssub.s32 %s11, 1
        %p121 = scmp.lt.s32.totalorder %s16, 1
        %s122 = scalar_select %p121, %s16, 1
        %s123 = smul.addr %s122, 5
        %s124 = smul.addr %s123, 4
        %s125 = scalar_lea.vmem %s0, %s124
        %p126 = pneg %p37
        %p127 = pneg %p34
        %p128 = pneg %p58
        %p129 = pneg %p55
        %p130 = pneg %p84
        %p131 = pneg %p81
        %s132 = sand.u32 %s71, 1
        %s133 = scalar_lea.sflag [#allocation3], %s132
        %s134 = sand.u32 %s71, 1
        %s135 = smul.addr %s134, 8
        %s136 = scalar_lea.vmem [#allocation2], %s135
        %p137 = scmp.lt.s32.totalorder %s16, 1
        %s138 = scalar_select %p137, %s16, 1
        %s139 = smul.addr %s138, 5
        %s140 = smul.addr %s139, 4
        %s141 = scalar_lea.vmem %s0, %s140
        %v143 = vld [vmem:[%s1] sm:$0xf]
        %v144 = vld [vmem:[%s141] sm:$0xf]
        %v145 = vld [vmem:[%s141 + $0x4] sm:$0xf]
        %v146 = vld [vmem:[%s141 + $0x8] sm:$0xf]
        %v147 = vld [vmem:[%s141 + $0xc] sm:$0xf]
        %v148 = vld [vmem:[%s141 + $0x10] sm:$0x3]
        %v154 = vunpack.c.l.b16 %v144
        %v155 = vunpack.c.l.b16 %v145
        %v156 = vunpack.c.l.b16 %v146
        %v157 = vunpack.c.l.b16 %v147
        %v158 = vunpack.c.l.b16 %v148
        %v159 = vpack.c.b16 %v155, %v154
        %v160 = vpack.c.b16 %v157, %v156
        %v161 = vpack.c.b16 %v158, %v158
        %vm164 = vcmask 293888
        %v166 = vsel %vm164, %v143, 0
        %vm168 = vcmask 1041408
        %v170 = vsel %vm168, %v161, 0
        %172 = vmatprep.subr.bf16.mxu0 0
        %173 = vmatpush1.bf16.msra.mxu0 %v159
        %174 = vmatprep.subr.bf16.mxu0 0
        %175 = vmatpush1.bf16.msra.mxu0 %v160
        %176 = vmatprep.subr.bf16.mxu0 0
        %177 = vmatpush1.bf16.msra.mxu0 %v170
        %178 = vmatprep.subr.bf16.mxu0 0
        %179 = vmatpush1.bf16.msra.mxu0 0
        %180 = vmatprep.subr.bf16.mxu0 0
        %181 = vmatpush1.bf16.msra.mxu0 0
        %182 = vmatprep.subr.bf16.mxu0 0
        %183 = vmatpush1.bf16.msra.mxu0 0
        %184 = vmatprep.subr.bf16.mxu0 0
        %185 = vmatpush1.bf16.msra.mxu0 0
        %186 = vmatprep.subr.bf16.mxu0 0
        %187 = vmatpush1.bf16.msra.mxu0 0
        %188 = vmatprep.subr.bf16.mxu0 0
        %189 = vmatpush1.bf16.msra.mxu0 0
        %190 = vmatprep.subr.bf16.mxu0 0
        %191 = vmatpush1.bf16.msra.mxu0 0
        %192 = vmatprep.subr.bf16.mxu0 0
        %193 = vmatpush1.bf16.msra.mxu0 0
        %194 = vmatprep.subr.bf16.mxu0 0
        %195 = vmatpush1.bf16.msra.mxu0 0
        %196 = vmatprep.subr.bf16.mxu0 0
        %197 = vmatpush1.bf16.msra.mxu0 0
        %198 = vmatprep.subr.bf16.mxu0 0
        %199 = vmatpush1.bf16.msra.mxu0 0
        %200 = vmatprep.subr.bf16.mxu0 0
        %201 = vmatpush1.bf16.msra.mxu0 0
        %202 = vmatprep.subr.bf16.mxu0 0
        %203 = vmatpush1.bf16.msra.mxu0 0
        %204 = vmatprep.mubr.bf16.mxu0 0
        %205 = vmatmul.mubr.bf16.gmra.mrb[0].mxu0 %v166
        %v206 = vpop.f32.mrb[0].mxu0
        %v207 = vadd.f32 0.0, %v206
        %v208 = vpop.f32.mrb[0].mxu0
        %v209 = vpop.f32.mrb[0].mxu0
        %v210 = vpop.f32.mrb[0].mxu0
        %211 = vdwg.mxu0
        %vm212 = vcmask 523264
        %v213 = vsel %vm212, %v207, 0.0
        %214 = vadd.xlane.f32.xlu0 %v213
        %v215 = vpop.xlane.xlu0 %214
        %v216 = vmul.f32 %v215, 0.015625
        %v217 = vsub.f32 %v207, %v216
        %v218 = vmul.f32 %v217, %v217
        %v219 = vsel %vm212, %v218, 0.0
        %220 = vadd.xlane.f32.xlu0 %v219
        %v221 = vpop.xlane.xlu0 %220
        %v222 = vmul.f32 %v221, 0.015625
        %v223 = vadd.f32 %v222, 1e-05
        %v224 = vrsqrt.pop %v223
        %v225 = vmul.f32 %v217, %v224
        %v226 = vmax.f32 %v225, 0.0
        %227 = vst.msk [vmem:[%s136] sm:$0xff] %vm212, %v226
        %s228 = sand.u32 %s71, 1
        %s229 = scalar_lea.sflag [#allocation3], %s228
        %s230 = sand.u32 %s71, 1
        %s231 = smul.addr %s230, 8
        %s232 = scalar_lea.vmem [#allocation2], %s231
        // Predicated region
        $region29: #{tpu_custom_call.1} parent=27 // pred_check
          %p233 = pneg %p81
        $region30: #{tpu_custom_call.1} parent=27 // pred_check_branch
          %235 = sbr.rel (%p233) target = $region32
        $region31: #{tpu_custom_call.1} parent=27 // pred_region
          %s237 = ssub.s32 128, 128
          %238 = vsyncadd %s229, %s237
          %s239 = smul.addr %s16, 128
          %s240 = scalar_lea.hbm %s2, %s239
          %s242 = sshll.u32 %s232, 4
          %s243 = int_to_ptr.vmem [resolvable:$true] %s242
          %245 = dma.vmem_to_hbm [thread:$0]  %s243, 128, %s240, %s229
        $region32: #{tpu_custom_call.1} parent=27 // pred_fallthru
          _
      $region28: #{tpu_custom_call.1} parent=5 // pred_fallthru
        _
      %p246 = scmp.le.s32.totalorder 2, %s11
      // Predicated region
      $region33: #{tpu_custom_call.1} parent=5 // pred_check
        %p247 = pneg %p246
      $region34: #{tpu_custom_call.1} parent=5 // pred_check_branch
        %249 = sbr.rel (%p247) target = $region36
      $region35: #{tpu_custom_call.1} parent=5 // pred_region
        %s250 = ssub.s32 %s11, 2
        // Predicated region
        $region37: #{tpu_custom_call.1} parent=35 // pred_check
          %p251 = pneg %p87
        $region38: #{tpu_custom_call.1} parent=35 // pred_check_branch
          %253 = sbr.rel (%p251) target = $region40
        $region39: #{tpu_custom_call.1} parent=35 // pred_region
          %s254 = sand.u32 %s72, 1
          %s255 = scalar_lea.sflag [#allocation3], %s254
          %s256 = sand.u32 %s72, 1
          %s257 = smul.addr %s256, 8
          %s258 = scalar_lea.vmem [#allocation2], %s257
          %259 = dma.done %s255, 128
        $region40: #{tpu_custom_call.1} parent=35 // pred_fallthru
          _
      $region36: #{tpu_custom_call.1} parent=5 // pred_fallthru
        _
    $region6: #{tpu_custom_call.1} parent=1 // loop_footer
      %s15 = sadd.s32 1, %s11
    $region7: #{tpu_custom_call.1} parent=1 // loop_footer_branch
      %10 = sbr.rel target = $region3
    $region8: #{tpu_custom_call.1} parent=1 // loop_exit
      _
    %260 = vsyncpa [#allocation3], 1
    %s261 = scalar_lea.sflag [#allocation3], 1
    %262 = vsyncpa %s261, 1

</llo_original>
